<compile_context>
chip_gen: v7x
topology: tpu7x:2x2x1
jax: 0.10.0
libtpu: 0.0.40
codegen_flags: <defaults>
</compile_context>

<pallas_src>
import functools
import math

import jax
import jax.numpy as jnp
from jax.experimental import pallas as pl
from jax.experimental.pallas import tpu as pltpu

_LANE = 128
_SUBLANE = 8
_MIB = 1024 * 1024


def _round_up(x: int, m: int) -> int:
    return ((x + m - 1) // m) * m


def _vmem_budgets():
    """Returns (per-tile output budget bytes, scoped-VMEM limit to request or None)."""
    try:
        vmem_cap = int(pltpu.get_tpu_info().vmem_capacity_bytes)
    except Exception:
        # Detection unavailable (interpret mode / older runtime): stay conservative.
        return 2 * _MIB, None
    if vmem_cap >= 96 * _MIB:
        # v5e / v6e: 128 MiB physical VMEM. ~8 MiB tiles (double-buffered ~16 MiB)
        # amortize the ~0.35us/step grid overhead; raise the scoped-VMEM limit
        # (v5e's default is only 16 MiB) with generous headroom.
        return 8 * _MIB, 64 * _MIB
    # v7x: 64 MiB physical / 32 MiB scoped default. Keep tiles at ~3 MiB so the
    # batch grid keeps >=2 steps for the 2-TensorCore split.
    return 3 * _MIB, None


def _pick_rows_tile(n_rows8: int, row_w: int, itemsize: int):
    """Pick a batch-row tile (multiple of 8) given the output row width."""
    budget, vmem_limit = _vmem_budgets()
    max_rows = budget // max(1, row_w * itemsize)
    max_rows = max(_SUBLANE, (max_rows // _SUBLANE) * _SUBLANE)
    tile = min(n_rows8, max_rows)
    # Guarantee >=2 grid steps whenever there is enough work so that
    # dimension_semantics=("parallel",) can shard the EUP-bound sin/cos across
    # both TensorCores on v7x (measured ~neutral on single-TC v5e/v6e).
    if n_rows8 >= 2 * _SUBLANE and tile > n_rows8 // 2:
        tile = max(_SUBLANE, ((n_rows8 // 2) // _SUBLANE) * _SUBLANE)
    return tile, vmem_limit


# ---------------------------------------------------------------------------
# Kernels
# ---------------------------------------------------------------------------
def _gfp_slab_kernel(t_ref, w_ref, out_ref, *, trig_dtype):
    # t_ref:   (TB, 1)        f32 time scalars, 2*pi already folded in.
    # w_ref:   (1, half_pad)  f32 frequencies (half_pad is a multiple of 128).
    # out_ref: (TB, 2*half_pad) sin slab then cos slab.
    half_pad = w_ref.shape[1]
    # Broadcasted outer product on the VPU; argument stays f32.
    proj = (t_ref[...].astype(jnp.float32) * w_ref[...].astype(jnp.float32))
    proj = proj.astype(trig_dtype)
    # Two unmasked, 128-lane-aligned slab stores (no concatenated full-row temp).
    out_ref[:, :half_pad] = jnp.sin(proj).astype(out_ref.dtype)
    out_ref[:, half_pad:] = jnp.cos(proj).astype(out_ref.dtype)


def _gfp_packed_kernel(t_ref, sel_ref, w_ref, ph_ref, out_ref, *, n_pack, trig_dtype):
    # Small-embed path: each 128-lane output row packs `n_pack` complete
    # [sin | cos] embedding rows, so every EUP lane does useful work.
    #   t_ref:   (TBg, n_pack) f32 grouped time scalars (2*pi folded in).
    #   sel_ref: (n_pack, 128) 0/1 rows expanding each scalar to its lane chunk.
    #   w_ref:   (1, 128) tiled [w, w];  ph_ref: (1, 128) tiled [0, pi/2].
    #   out_ref: (TBg, 128).
    # cos(x) is computed as sin(x + pi/2): one transcendental per output element
    # and a single lane-dense store (no concat, no zero-padding on the EUP).
    t = t_ref[...].astype(jnp.float32)
    t_lane = t[:, 0:1] * sel_ref[0:1, :]
    for p in range(1, n_pack):  # static unroll; cheap VPU broadcasts/FMAs
        t_lane = t_lane + t[:, p:p + 1] * sel_ref[p:p + 1, :]
    proj = (t_lane * w_ref[...] + ph_ref[...]).astype(trig_dtype)
    out_ref[...] = jnp.sin(proj).astype(out_ref.dtype)


# ---------------------------------------------------------------------------
# Wrappers
# ---------------------------------------------------------------------------
def _slab_path(t_scaled, w, B, half, out_dtype, itemsize, trig_dtype):
    w32 = w.astype(jnp.float32)
    half_pad = _round_up(half, _LANE)
    if half_pad != half:
        w32 = jnp.pad(w32, (0, half_pad - half))
    embed_pad = 2 * half_pad

    b8 = _round_up(max(B, 1), _SUBLANE)
    tb, vmem_limit = _pick_rows_tile(b8, embed_pad, itemsize)
    b_pad = _round_up(b8, tb)
    t_pad = jnp.pad(t_scaled, (0, b_pad - B)) if b_pad != B else t_scaled

    t2 = t_pad.reshape(b_pad, 1)
    w2 = w32.reshape(1, half_pad)

    kernel = functools.partial(_gfp_slab_kernel, trig_dtype=trig_dtype)
    cost = pl.CostEstimate(
        flops=2 * b_pad * embed_pad,
        transcendentals=b_pad * embed_pad,
        bytes_accessed=b_pad * embed_pad * itemsize + b_pad * 4 + half_pad * 4,
    )
    out_pad = pl.pallas_call(
        kernel,
        out_shape=jax.ShapeDtypeStruct((b_pad, embed_pad), out_dtype),
        grid_spec=pltpu.PrefetchScalarGridSpec(
            num_scalar_prefetch=0,
            grid=(b_pad // tb,),
            in_specs=[
                pl.BlockSpec((tb, 1), lambda i: (i, 0)),
                pl.BlockSpec((1, half_pad), lambda i: (0, 0)),
            ],
            out_specs=pl.BlockSpec((tb, embed_pad), lambda i: (i, 0)),
        ),
        compiler_params=pltpu.CompilerParams(
            dimension_semantics=("parallel",),
            vmem_limit_bytes=vmem_limit,
        ),
        cost_estimate=cost,
    )(t2, w2)

    out = out_pad[:B]
    if half_pad != half:
        # Rare fallback (half not a multiple of 128 and embed_dim not a divisor
        # of 128): strip the zero-padded frequency columns. A layout-aware
        # consumer could take the padded (B, 2*half_pad) slab directly instead.
        out = jnp.concatenate(
            [out[:, :half], out[:, half_pad:half_pad + half]], axis=-1)
    return out


def _packed_path(t_scaled, w, B, half, out_dtype, itemsize, trig_dtype):
    embed_dim = 2 * half
    n_pack = _LANE // embed_dim  # complete embedding rows per 128-lane row

    rows = -(-max(B, 1) // n_pack)  # ceil
    rows8 = _round_up(rows, _SUBLANE)
    tbg, vmem_limit = _pick_rows_tile(rows8, _LANE, itemsize)
    rows_pad = _round_up(rows8, tbg)

    b_needed = rows_pad * n_pack
    t_pad = jnp.pad(t_scaled, (0, b_needed - B)) if b_needed != B else t_scaled
    t_grp = t_pad.reshape(rows_pad, n_pack)

    w32 = w.astype(jnp.float32)
    w_lane = jnp.tile(jnp.concatenate([w32, w32]), n_pack).reshape(1, _LANE)
    ph_lane = jnp.tile(
        jnp.concatenate([jnp.zeros((half,), jnp.float32),
                         jnp.full((half,), 0.5 * math.pi, jnp.float32)]),
        n_pack).reshape(1, _LANE)
    chunk = jnp.arange(_LANE, dtype=jnp.int32) // embed_dim
    sel = (chunk[None, :] == jnp.arange(n_pack, dtype=jnp.int32)[:, None])
    sel = sel.astype(jnp.float32)

    kernel = functools.partial(_gfp_packed_kernel, n_pack=n_pack,
                               trig_dtype=trig_dtype)
    cost = pl.CostEstimate(
        flops=(2 * n_pack + 3) * rows_pad * _LANE,
        transcendentals=rows_pad * _LANE,
        bytes_accessed=(rows_pad * _LANE * itemsize + b_needed * 4
                        + (n_pack + 2) * _LANE * 4),
    )
    out_packed = pl.pallas_call(
        kernel,
        out_shape=jax.ShapeDtypeStruct((rows_pad, _LANE), out_dtype),
        grid_spec=pltpu.PrefetchScalarGridSpec(
            num_scalar_prefetch=0,
            grid=(rows_pad // tbg,),
            in_specs=[
                pl.BlockSpec((tbg, n_pack), lambda i: (i, 0)),
                pl.BlockSpec((n_pack, _LANE), lambda i: (0, 0)),
                pl.BlockSpec((1, _LANE), lambda i: (0, 0)),
                pl.BlockSpec((1, _LANE), lambda i: (0, 0)),
            ],
            out_specs=pl.BlockSpec((tbg, _LANE), lambda i: (i, 0)),
        ),
        compiler_params=pltpu.CompilerParams(
            dimension_semantics=("parallel",),
            vmem_limit_bytes=vmem_limit,
        ),
        cost_estimate=cost,
    )(t_grp, sel, w_lane, ph_lane)

    # Free row-major reshape: (rows_pad, 128) -> (rows_pad*n_pack, embed_dim).
    out = out_packed.reshape(rows_pad * n_pack, embed_dim)
    return out[:B]


def gaussian_fourier_projection(t: jax.Array, w: jax.Array, *,
                                compute_trig_in_bf16: bool = False) -> jax.Array:
    """t: (B,) scalars, w: (embed_dim//2,) fixed frequencies -> (B, embed_dim).

    Matches the PyTorch forward: concat([sin(2*pi*t*W), cos(2*pi*t*W)], -1),
    with the output in W's dtype and the argument computed in float32.

    compute_trig_in_bf16: opt-in bf16 transcendentals for bf16 outputs (use on
    v6e/v7x where the EUP has a bf16 path; keep False on v5e).
    """
    if t.ndim != 1 or w.ndim != 1:
        raise ValueError("expected t of shape (B,) and w of shape (embed_dim//2,)")
    out_dtype = w.dtype
    B = t.shape[0]
    half = w.shape[0]
    embed_dim = 2 * half
    if half == 0:
        return jnp.zeros((B, 0), dtype=out_dtype)
    itemsize = jnp.dtype(out_dtype).itemsize

    # Keep the sin/cos argument in f32 regardless of W's dtype, and fold the
    # 2*pi constant into t (B scalars, negligible) with the same multiply order
    # as the reference so the in-kernel product matches it bit-for-bit.
    t_scaled = (2.0 * math.pi) * t.astype(jnp.float32)

    use_bf16_trig = bool(compute_trig_in_bf16) and out_dtype == jnp.bfloat16
    trig_dtype = jnp.bfloat16 if use_bf16_trig else jnp.float32

    if half % _LANE != 0 and _LANE % embed_dim == 0:
        # Small embed dims: packed layout, full EUP lane utilization.
        return _packed_path(t_scaled, w, B, half, out_dtype, itemsize, trig_dtype)
    # half % 128 == 0: fully aligned, zero padding. Otherwise: padded fallback.
    return _slab_path(t_scaled, w, B, half, out_dtype, itemsize, trig_dtype)


def gaussian_fourier_projection_ref(t: jax.Array, w: jax.Array) -> jax.Array:
    t = t.astype(w.dtype)
    proj = 2.0 * math.pi * t[:, None] * w[None, :]
    return jnp.concatenate([jnp.sin(proj), jnp.cos(proj)], axis=-1)


if __name__ == "__main__":
    root = jax.random.PRNGKey(0)

    # (embed_dim, batch): small-embed packed path, 128-aligned two-slab path
    # with a multi-step parallel grid, and the padded fallback path.
    cases = [(32, 8), (256, 24), (40, 5)]
    keys = jax.random.split(root, 2 * len(cases))

    for idx, (embed_dim, batch) in enumerate(cases):
        k_w, k_t = keys[2 * idx], keys[2 * idx + 1]
        # Module-default construction: W = randn(embed_dim // 2) * (2 * pi).
        W = jax.random.normal(k_w, (embed_dim // 2,), dtype=jnp.float32) * (2.0 * math.pi)
        t = jax.random.uniform(k_t, (batch,), dtype=jnp.float32)

        out = jax.block_until_ready(gaussian_fourier_projection(t, W))
        ref = gaussian_fourier_projection_ref(t, W)

        assert out.shape == (batch, embed_dim), (out.shape, embed_dim, batch)
        # Few-ulp tolerance: |2*pi*t*W| reaches ~100 so single-f32-ulp argument
        # differences map to ~1e-5 in sin/cos, and the packed path evaluates
        # cos(x) as sin(x + pi/2).
        assert jnp.allclose(out, ref, atol=2e-5, rtol=2e-5), (embed_dim, batch)

    print("KERNEL_OK")
</pallas_src>

<mosaic_0001>
module attributes {stable_mosaic.version = 11 : i64} {
  func.func @_gfp_packed_kernel(%arg0: i32, %arg1: memref<8x4xf32, #tpu.memory_space<vmem>>, %arg2: memref<4x128xf32, #tpu.memory_space<vmem>>, %arg3: memref<1x128xf32, #tpu.memory_space<vmem>>, %arg4: memref<1x128xf32, #tpu.memory_space<vmem>>, %arg5: memref<8x128xf32, #tpu.memory_space<vmem>>) attributes {dimension_semantics = [#tpu.dimension_semantics<parallel>], iteration_bounds = array<i64: 1>, scalar_prefetch = 0 : i64, scratch_operands = 0 : i64, tpu.core_type = #tpu.core_type<tc>, window_params = [{transform_indices = @transform_0, window_bounds = array<i64: 8, 4>}, {pipeline_mode = #tpu.pipeline_mode<synchronous>, transform_indices = @transform_1, window_bounds = array<i64: 4, 128>}, {pipeline_mode = #tpu.pipeline_mode<synchronous>, transform_indices = @transform_2, window_bounds = array<i64: 1, 128>}, {pipeline_mode = #tpu.pipeline_mode<synchronous>, transform_indices = @transform_3, window_bounds = array<i64: 1, 128>}, {transform_indices = @transform_4, window_bounds = array<i64: 8, 128>}]} {
    %c0 = arith.constant 0 : index
    %c0_0 = arith.constant 0 : index
    %0 = vector.load %arg1[%c0, %c0_0] : memref<8x4xf32, #tpu.memory_space<vmem>>, vector<8x4xf32>
    %1 = vector.extract_strided_slice %0 {offsets = [0, 0], sizes = [8, 1], strides = [1, 1]} : vector<8x4xf32> to vector<8x1xf32>
    %c0_1 = arith.constant 0 : index
    %c0_2 = arith.constant 0 : index
    %2 = vector.load %arg2[%c0_1, %c0_2] : memref<4x128xf32, #tpu.memory_space<vmem>>, vector<1x128xf32>
    %3 = vector.broadcast %1 : vector<8x1xf32> to vector<8x128xf32>
    %4 = vector.broadcast %2 : vector<1x128xf32> to vector<8x128xf32>
    %5 = arith.mulf %3, %4 : vector<8x128xf32>
    %6 = vector.extract_strided_slice %0 {offsets = [0, 1], sizes = [8, 1], strides = [1, 1]} : vector<8x4xf32> to vector<8x1xf32>
    %c1 = arith.constant 1 : index
    %c0_3 = arith.constant 0 : index
    %7 = vector.load %arg2[%c1, %c0_3] : memref<4x128xf32, #tpu.memory_space<vmem>>, vector<1x128xf32>
    %8 = vector.broadcast %6 : vector<8x1xf32> to vector<8x128xf32>
    %9 = vector.broadcast %7 : vector<1x128xf32> to vector<8x128xf32>
    %10 = arith.mulf %8, %9 : vector<8x128xf32>
    %11 = arith.addf %5, %10 : vector<8x128xf32>
    %12 = vector.extract_strided_slice %0 {offsets = [0, 2], sizes = [8, 1], strides = [1, 1]} : vector<8x4xf32> to vector<8x1xf32>
    %c2 = arith.constant 2 : index
    %c0_4 = arith.constant 0 : index
    %13 = vector.load %arg2[%c2, %c0_4] : memref<4x128xf32, #tpu.memory_space<vmem>>, vector<1x128xf32>
    %14 = vector.broadcast %12 : vector<8x1xf32> to vector<8x128xf32>
    %15 = vector.broadcast %13 : vector<1x128xf32> to vector<8x128xf32>
    %16 = arith.mulf %14, %15 : vector<8x128xf32>
    %17 = arith.addf %11, %16 : vector<8x128xf32>
    %18 = vector.extract_strided_slice %0 {offsets = [0, 3], sizes = [8, 1], strides = [1, 1]} : vector<8x4xf32> to vector<8x1xf32>
    %c3 = arith.constant 3 : index
    %c0_5 = arith.constant 0 : index
    %19 = vector.load %arg2[%c3, %c0_5] : memref<4x128xf32, #tpu.memory_space<vmem>>, vector<1x128xf32>
    %20 = vector.broadcast %18 : vector<8x1xf32> to vector<8x128xf32>
    %21 = vector.broadcast %19 : vector<1x128xf32> to vector<8x128xf32>
    %22 = arith.mulf %20, %21 : vector<8x128xf32>
    %23 = arith.addf %17, %22 : vector<8x128xf32>
    %c0_6 = arith.constant 0 : index
    %c0_7 = arith.constant 0 : index
    %24 = vector.load %arg3[%c0_6, %c0_7] : memref<1x128xf32, #tpu.memory_space<vmem>>, vector<1x128xf32>
    %25 = vector.broadcast %24 : vector<1x128xf32> to vector<8x128xf32>
    %26 = arith.mulf %23, %25 : vector<8x128xf32>
    %c0_8 = arith.constant 0 : index
    %c0_9 = arith.constant 0 : index
    %27 = vector.load %arg4[%c0_8, %c0_9] : memref<1x128xf32, #tpu.memory_space<vmem>>, vector<1x128xf32>
    %28 = vector.broadcast %27 : vector<1x128xf32> to vector<8x128xf32>
    %29 = arith.addf %26, %28 : vector<8x128xf32>
    %30 = math.sin %29 : vector<8x128xf32>
    %c0_10 = arith.constant 0 : index
    %c0_11 = arith.constant 0 : index
    %31 = vector.load %arg5[%c0_10, %c0_11] : memref<8x128xf32, #tpu.memory_space<vmem>>, vector<8x128xf32>
    tpu.vector_store %arg5[%c0_10, %c0_11], %30 {strides = array<i32>} : memref<8x128xf32, #tpu.memory_space<vmem>>, vector<8x128xf32>,
    return
  }
  func.func @transform_0(%arg0: i32) -> (i32, i32) {
    %c0_i32 = arith.constant 0 : i32
    %c0_i32_0 = arith.constant 0 : i32
    return %arg0, %c0_i32 : i32, i32
  }
  func.func @transform_1(%arg0: i32) -> (i32, i32) {
    %c0_i32 = arith.constant 0 : i32
    %c0_i32_0 = arith.constant 0 : i32
    %c0_i32_1 = arith.constant 0 : i32
    return %c0_i32, %c0_i32_0 : i32, i32
  }
  func.func @transform_2(%arg0: i32) -> (i32, i32) {
    %c0_i32 = arith.constant 0 : i32
    %c0_i32_0 = arith.constant 0 : i32
    %c0_i32_1 = arith.constant 0 : i32
    return %c0_i32, %c0_i32_0 : i32, i32
  }
  func.func @transform_3(%arg0: i32) -> (i32, i32) {
    %c0_i32 = arith.constant 0 : i32
    %c0_i32_0 = arith.constant 0 : i32
    %c0_i32_1 = arith.constant 0 : i32
    return %c0_i32, %c0_i32_0 : i32, i32
  }
  func.func @transform_4(%arg0: i32) -> (i32, i32) {
    %c0_i32 = arith.constant 0 : i32
    %c0_i32_0 = arith.constant 0 : i32
    return %arg0, %c0_i32 : i32, i32
  }
}

</mosaic_0001>

<llo_original>
// kernel: tpu_custom_call.1
$region0: #{tpu_custom_call.1}
  #allocation0 [shape = 'u32[]', space=smem, size = 0x4, offset = 0x4, fixed_abs, tag = 'smem constant byte address 0x4 - core index']
  #allocation1 [shape = 'u32[144,128]{1,0:T(1,128)}', space=vmem, size = 0x12000, scoped, tag = 'internal scratch']
  %s0 = inlined_call_operand.vmem [shape: f32[8,4], index: 0, kind: input, shape index: {}]
  %s1 = inlined_call_operand.vmem [shape: f32[4,128], index: 1, kind: input, shape index: {}]
  %s2 = inlined_call_operand.vmem [shape: f32[1,128], index: 2, kind: input, shape index: {}]
  %s3 = inlined_call_operand.vmem [shape: f32[1,128], index: 3, kind: input, shape index: {}]
  %s4 = inlined_call_operand.hbm [shape: f32[8,128], index: 4, kind: output, shape index: {}]
  %s5 = sld [smem:[#allocation0]]
  $region26: #{tpu_custom_call.1} parent=0
    _
  %s7 = ssub.s32 1, %s5
  %s8 = scalar_select 0, %s7, %s5
  $region1: #{tpu_custom_call.1} parent=0
    #allocation2 [shape = 'u8[4096]{0}', space=vmem, size = 0x1000, scoped, tag = 'output window, operand 0, single buffered']
    #allocation3 [shape = 's32[1]{0}', space=sflag, size = 0x4, scoped, tag = 'scoped memory for tpu_custom_call.1']
    %9 = vsyncpa [#allocation3], 0
    // Predicated region
    $region2: #{tpu_custom_call.1} parent=1 // pred_check
      _
    $region3: #{tpu_custom_call.1} parent=1 // pred_check_branch
      %11 = sbr.rel (0) target = $region5
    $region4: #{tpu_custom_call.1} parent=1 // pred_region
      _
    $region5: #{tpu_custom_call.1} parent=1 // pred_fallthru
      _
    // Predicated region
    $region6: #{tpu_custom_call.1} parent=1 // pred_check
      _
    $region7: #{tpu_custom_call.1} parent=1 // pred_check_branch
      %13 = sbr.rel (0) target = $region9
    $region8: #{tpu_custom_call.1} parent=1 // pred_region
      _
    $region9: #{tpu_custom_call.1} parent=1 // pred_fallthru
      _
    // Predicated region
    $region10: #{tpu_custom_call.1} parent=1 // pred_check
      _
    $region11: #{tpu_custom_call.1} parent=1 // pred_check_branch
      %15 = sbr.rel (0) target = $region13
    $region12: #{tpu_custom_call.1} parent=1 // pred_region
      _
    $region13: #{tpu_custom_call.1} parent=1 // pred_fallthru
      _
    // Predicated region
    $region14: #{tpu_custom_call.1} parent=1 // pred_check
      _
    $region15: #{tpu_custom_call.1} parent=1 // pred_check_branch
      %17 = sbr.rel (0) target = $region17
    $region16: #{tpu_custom_call.1} parent=1 // pred_region
      _
    $region17: #{tpu_custom_call.1} parent=1 // pred_fallthru
      _
    %v18 = vld [vmem:[%s0] sm:$0xff]
    %v19 = vld [vmem:[%s1] sm:$0x1]
    %21 = vset.pattern.permute.xlu0 0
    %22 = vperm.xlu0 %21, %v18
    %v23 = vpop.permute.xlu0 %22
    %v25 = vlaneseq
    %v26 = vshrl.u32 %v25, 7
    %v27 = vsub.s32 0, %v26
    %v28 = vrot.slane %v19, %v27
    %v29 = vmul.f32 %v23, %v28
    %v30 = vld [vmem:[%s1 + $0x1] sm:$0x1]
    %31 = vset.pattern.permute.xlu0 1
    %32 = vperm.xlu0 %31, %v18
    %v33 = vpop.permute.xlu0 %32
    %v35 = vlaneseq
    %v36 = vshrl.u32 %v35, 7
    %v37 = vsub.s32 0, %v36
    %v38 = vrot.slane %v30, %v37
    %v39 = vmul.f32 %v33, %v38
    %v40 = vadd.f32 %v29, %v39
    %v41 = vld [vmem:[%s1 + $0x2] sm:$0x1]
    %42 = vset.pattern.permute.xlu0 2
    %43 = vperm.xlu0 %42, %v18
    %v44 = vpop.permute.xlu0 %43
    %v46 = vlaneseq
    %v47 = vshrl.u32 %v46, 7
    %v48 = vsub.s32 0, %v47
    %v49 = vrot.slane %v41, %v48
    %v50 = vmul.f32 %v44, %v49
    %v51 = vadd.f32 %v40, %v50
    %v52 = vld [vmem:[%s1 + $0x3] sm:$0x1]
    %53 = vset.pattern.permute.xlu0 3
    %54 = vperm.xlu0 %53, %v18
    %v55 = vpop.permute.xlu0 %54
    %v57 = vlaneseq
    %v58 = vshrl.u32 %v57, 7
    %v59 = vsub.s32 0, %v58
    %v60 = vrot.slane %v52, %v59
    %v61 = vmul.f32 %v55, %v60
    %v62 = vadd.f32 %v51, %v61
    %v63 = vld [vmem:[%s2] sm:$0x1]
    %v65 = vlaneseq
    %v66 = vshrl.u32 %v65, 7
    %v67 = vsub.s32 0, %v66
    %v68 = vrot.slane %v63, %v67
    %v70 = vmul.f32 %v62, %v68
    %v71 = vld [vmem:[%s3] sm:$0x1]
    %v73 = vlaneseq
    %v74 = vshrl.u32 %v73, 7
    %v75 = vsub.s32 0, %v74
    %v76 = vrot.slane %v71, %v75
    %v78 = vadd.f32 %v70, %v76
    %v79 = vand.u32 2147483647, %v78
    %vm80 = vcmp.le.f32.partialorder %v79, 0.7853982
    %vm81 = vcmp.lt.s32.totalorder %v78, 0
    %v82 = vand.u32 %v78, 2139095040
    %v83 = vshrl.u32 %v82, 23
    %v84 = vsub.s32 %v83, 127
    %v85 = vand.u32 2147483647, %v78
    %v86 = vand.u32 %v85, 8388607
    %v87 = vor.u32 %v86, 8388608
    %v88 = vsub.s32 0, %v87
    %v89 = vadd.s32 %v84, 1
    %vm90 = vcmp.gt.s32.totalorder %v89, 0
    %v91 = vsel %vm90, %v89, 0
    %v92 = vshrl.u32 %v91, 5
    %v93 = vand.u32 %v91, 31
    %v94 = vsub.s32 32, %v93
    %v95 = vshrl.u32 683565275, %v94
    %v96 = vshll.u32 683565275, %v93
    %v97 = vshrl.u32 2475754826, %v94
    %v98 = vor.u32 %v96, %v97
    %v99 = vshll.u32 2475754826, %v93
    %v100 = vshrl.u32 2131351028, %v94
    %v101 = vor.u32 %v99, %v100
    %v102 = vshll.u32 2131351028, %v93
    %v103 = vshrl.u32 2102212464, %v94
    %v104 = vor.u32 %v102, %v103
    %v105 = vshll.u32 2102212464, %v93
    %v106 = vshrl.u32 920167782, %v94
    %v107 = vor.u32 %v105, %v106
    %v108 = vshll.u32 920167782, %v93
    %v109 = vshrl.u32 1326507024, %v94
    %v110 = vor.u32 %v108, %v109
    %vm111 = vcmp.lt.s32.totalorder %v92, 1
    %vm112 = vcmp.lt.s32.totalorder %v92, 2
    %vm113 = vcmp.lt.s32.totalorder %v92, 3
    %vm114 = vcmp.lt.s32.totalorder %v92, 4
    %v115 = vsel %vm111, %v95, %v98
    %v116 = vsel %vm114, %v104, 2102212464
    %v117 = vsel %vm113, %v101, %v116
    %v118 = vsel %vm112, %v115, %v117
    %v119 = vsel %vm111, %v98, %v101
    %v120 = vsel %vm114, %v107, 920167782
    %v121 = vsel %vm113, %v104, %v120
    %v122 = vsel %vm112, %v119, %v121
    %v123 = vsel %vm111, %v101, %v104
    %v124 = vsel %vm114, %v110, 1326507024
    %v125 = vsel %vm113, %v107, %v124
    %v126 = vsel %vm112, %v123, %v125
    %v127 = vshll.u32 %v87, 8
    %v128 = vmul.u32.u64.compose %v127, %v126
    %v129 = vextract.low.u32 %v128
    %v130 = vextract.high.u32 %v128
    %v131 = vmul.u32.u64.compose %v127, %v122
    %v132 = vextract.low.u32 %v131
    %v133 = vextract.high.u32 %v131
    %v134 = vmul.u32 %v127, %v118
    %v135 = vadd.s32 %v130, %v132
    %vm136 = vc.u32 %v130, %v132
    %v137 = vadd.s32 %v133, 1
    %v138 = vsel %vm136, %v137, %v133
    %v139 = vadd.s32 %v134, %v138
    %v140 = vadd.s32 %v139, 536870912
    %v141 = vshrl.u32 %v140, 30
    %v142 = vshll.u32 %v141, 30
    %v143 = vsub.s32 %v139, %v142
    %vm144 = vcmp.lt.s32.totalorder %v143, 0
    %v145 = vsub.s32 0, %v143
    %v146 = vsel %vm144, %v145, %v143
    %v147 = vclz %v146
    %v148 = vsub.s32 %v147, 2
    %vm149 = vcmp.gt.s32.totalorder 0, %v148
    %v150 = vsel %vm149, 0, %v148
    %v151 = vsub.s32 32, %v150
    %v152 = vshll.u32 %v143, %v150
    %v153 = vshrl.u32 %v135, %v151
    %v154 = vor.u32 %v152, %v153
    %v155 = vsub.s32 4294967266, %v150
    %v156 = vadd.s32 %v155, 127
    %v157 = vshll.u32 %v156, 23
    %v158 = vor.u32 4788187, %v157
    %v159 = vand.u32 2147483647, %v158
    %v161 = vcvt.s32.f32 %v154
    %v162 = vmul.f32 %v161, %v159
    %v163 = vxor.u32 %v162, 2147483648
    %v164 = vsel %vm81, %v163, %v162
    %v165 = vsub.s32 4, %v141
    %v166 = vsel %vm81, %v165, %v141
    %v167 = vsel %vm80, %v78, %v164
    %v168 = vsel %vm80, 0, %v166
    %v169 = vcosq.f32.pop %v167
    %v170 = vsinq.f32.pop %v167
    %vm171 = vweird.f32 %v78
    %v172 = vadd.s32 %v168, 3
    %v173 = vand.u32 %v172, 3
    %vm174 = vcmp.lt.s32.totalorder %v173, 2
    %vm175 = vcmp.eq.s32.totalorder %v173, 0
    %v176 = vxor.u32 %v170, 2147483648
    %v177 = vsel %vm175, %v169, %v176
    %vm178 = vcmp.eq.s32.totalorder %v173, 2
    %v179 = vxor.u32 %v169, 2147483648
    %v180 = vsel %vm178, %v179, %v170
    %v181 = vsel %vm174, %v177, %v180
    %v182 = vsel %vm171, nan, %v181
    %183 = vst [vmem:[#allocation2] sm:$0xff] %v182
    // Predicated region
    $region18: #{tpu_custom_call.1} parent=1 // pred_check
      _
    $region19: #{tpu_custom_call.1} parent=1 // pred_check_branch
      %185 = sbr.rel (0) target = $region21
    $region20: #{tpu_custom_call.1} parent=1 // pred_region
      %s187 = ssub.s32 128, 128
      %188 = vsyncadd [#allocation3], %s187
      %s190 = sshll.u32 [#allocation2], 4
      %s191 = int_to_ptr.vmem [resolvable:$true] %s190
      %193 = dma.vmem_to_hbm [thread:$0]  %s191, 128, %s4, [#allocation3]
    $region21: #{tpu_custom_call.1} parent=1 // pred_fallthru
      _
    // Predicated region
    $region22: #{tpu_custom_call.1} parent=1 // pred_check
      _
    $region23: #{tpu_custom_call.1} parent=1 // pred_check_branch
      %195 = sbr.rel (0) target = $region25
    $region24: #{tpu_custom_call.1} parent=1 // pred_region
      %196 = dma.done [#allocation3], 128
    $region25: #{tpu_custom_call.1} parent=1 // pred_fallthru
      _
    %197 = vsyncpa [#allocation3], 1

</llo_original>
